<compile_context>
chip_gen: v5e
topology: v5e:2x2
jax: 0.10.0
libtpu: 0.0.40
codegen_flags: <defaults>
</compile_context>

<pallas_src>
import jax
import jax.numpy as jnp
from jax.experimental import pallas as pl
from jax.experimental.pallas import tpu as pltpu


def autoencoder_kernel(x_ref, w_enc_ref, w_dec_ref, b_ref, out_ref):
    """Fused encoder->decoder forward for one batch tile: two MXU matmuls + bias."""
    x = x_ref[...]                                                   # (TB, D)
    enc = jnp.dot(x, w_enc_ref[...],
                  preferred_element_type=jnp.float32)                # (TB, Lp) f32
    dec = jnp.dot(enc.astype(w_dec_ref.dtype), w_dec_ref[...],
                  preferred_element_type=jnp.float32) + b_ref[...]   # (TB, D) f32
    out_ref[...] = dec.astype(out_ref.dtype)


def autoencoder_forward(x, w_enc, b_enc, w_dec, b_dec, *,
                        block_b=128, compute_dtype=None):
    """x: (B, D). w_enc: (D, L), b_enc: (1, L), w_dec: (L, D), b_dec: (1, D).

    compute_dtype: None -> f32 matmuls; jnp.bfloat16 -> bf16 MXU operands with
    f32 accumulation (recommended on v6e/v7x).
    """
    B, D = x.shape
    L = w_enc.shape[1]
    out_dtype = x.dtype

    # Fold encoder bias into decoder bias (f32, on the host side of the kernel).
    b_fold = (b_enc.astype(jnp.float32) @ w_dec.astype(jnp.float32)
              + b_dec.astype(jnp.float32))                           # (1, D) f32

    # Zero-pad latent dim to a multiple of 128 lanes for MXU occupancy (exact).
    Lp = ((L + 127) // 128) * 128
    if Lp != L:
        w_enc = jnp.pad(w_enc, ((0, 0), (0, Lp - L)))
        w_dec = jnp.pad(w_dec, ((0, Lp - L), (0, 0)))

    # Optional bf16 matmul operands (bias add + accumulation stay f32).
    if compute_dtype is not None:
        x_mm = x.astype(compute_dtype)
        w_enc = w_enc.astype(compute_dtype)
        w_dec = w_dec.astype(compute_dtype)
    else:
        x_mm = x

    # Batch tiling: full-array block when small, otherwise block_b with padding
    # so the grid divides evenly (ragged tail handled by wrapper pad + slice).
    if B <= block_b:
        tb, Bp = B, B
    else:
        tb = block_b
        Bp = pl.cdiv(B, tb) * tb
        if Bp != B:
            x_mm = jnp.pad(x_mm, ((0, Bp - B), (0, 0)))
    grid = (Bp // tb,)

    # VMEM budget: double-buffered x/out tiles + weights + f32 intermediate.
    x_item = jnp.dtype(x_mm.dtype).itemsize
    w_item = jnp.dtype(w_enc.dtype).itemsize
    o_item = jnp.dtype(out_dtype).itemsize
    needed = (2 * (D * Lp * w_item) * 2          # both weight mats (double-buffered)
              + D * 4 * 2                        # folded bias
              + 2 * tb * D * (x_item + o_item)   # double-buffered x + out tiles
              + tb * Lp * 4)                     # f32 latent intermediate
    vmem_limit = int(min(max(2 * needed, 32 * 1024 * 1024), 48 * 1024 * 1024))

    cost = pl.CostEstimate(
        flops=int(2 * Bp * D * Lp * 2),          # two matmuls
        transcendentals=0,
        bytes_accessed=int(Bp * D * x_item + 2 * D * Lp * w_item
                           + D * 4 + Bp * D * o_item),
    )

    out = pl.pallas_call(
        autoencoder_kernel,
        out_shape=jax.ShapeDtypeStruct((Bp, D), out_dtype),
        grid=grid,
        in_specs=[
            pl.BlockSpec((tb, D), lambda i: (i, 0)),   # x tile (pipelined)
            pl.BlockSpec((D, Lp), lambda i: (0, 0)),   # encoder weight (constant)
            pl.BlockSpec((Lp, D), lambda i: (0, 0)),   # decoder weight (constant)
            pl.BlockSpec((1, D), lambda i: (0, 0)),    # folded bias (constant)
        ],
        out_specs=pl.BlockSpec((tb, D), lambda i: (i, 0)),
        compiler_params=pltpu.CompilerParams(
            dimension_semantics=("parallel",),         # megacore on v7x
            vmem_limit_bytes=vmem_limit,
        ),
        cost_estimate=cost,
    )(x_mm, w_enc, w_dec, b_fold)

    return out[:B] if Bp != B else out


def init_params(key, input_size, latent_dim):
    """Deterministic init matching nn.Linear's uniform(-1/sqrt(fan_in), 1/sqrt(fan_in))."""
    k1, k2, k3, k4 = jax.random.split(key, 4)
    bound_enc = 1.0 / (input_size ** 0.5)
    bound_dec = 1.0 / (latent_dim ** 0.5)
    # stored as (in_features, out_features) == PyTorch weight transposed
    w_enc = jax.random.uniform(k1, (input_size, latent_dim), jnp.float32,
                               -bound_enc, bound_enc)
    b_enc = jax.random.uniform(k2, (1, latent_dim), jnp.float32,
                               -bound_enc, bound_enc)
    w_dec = jax.random.uniform(k3, (latent_dim, input_size), jnp.float32,
                               -bound_dec, bound_dec)
    b_dec = jax.random.uniform(k4, (1, input_size), jnp.float32,
                               -bound_dec, bound_dec)
    return w_enc, b_enc, w_dec, b_dec


if __name__ == "__main__":
    input_size = 256
    latent_dim = 32

    key = jax.random.PRNGKey(0)
    kx, kp, kx2 = jax.random.split(key, 3)
    w_enc, b_enc, w_dec, b_dec = init_params(kp, input_size, latent_dim)

    # --- small batch, f32 path (single grid step) ---
    x = jax.random.normal(kx, (8, input_size), jnp.float32)
    out = jax.block_until_ready(autoencoder_forward(x, w_enc, b_enc, w_dec, b_dec))
    ref = (x @ w_enc + b_enc) @ w_dec + b_dec
    assert out.shape == x.shape
    assert jnp.allclose(out, ref, atol=1e-4, rtol=1e-4), \
        float(jnp.max(jnp.abs(out - ref)))

    # --- larger batch: exercises the batch grid (2 tiles) + ragged tail padding ---
    x2 = jax.random.normal(kx2, (200, input_size), jnp.float32)
    ref2 = (x2 @ w_enc + b_enc) @ w_dec + b_dec
    out2 = jax.block_until_ready(
        autoencoder_forward(x2, w_enc, b_enc, w_dec, b_dec, block_b=128))
    assert out2.shape == x2.shape
    assert jnp.allclose(out2, ref2, atol=1e-4, rtol=1e-4), \
        float(jnp.max(jnp.abs(out2 - ref2)))

    # --- bf16 matmul operands (v6e/v7x fast path), f32 accumulation ---
    out2_bf16 = jax.block_until_ready(
        autoencoder_forward(x2, w_enc, b_enc, w_dec, b_dec, block_b=128,
                            compute_dtype=jnp.bfloat16))
    rel = jnp.linalg.norm(out2_bf16 - ref2) / jnp.linalg.norm(ref2)
    assert float(rel) < 3e-2, float(rel)

    print("KERNEL_OK")
</pallas_src>

<mosaic_0001>
module attributes {stable_mosaic.version = 11 : i64} {
  func.func @autoencoder_kernel(%arg0: i32, %arg1: memref<8x256xf32, #tpu.memory_space<vmem>>, %arg2: memref<256x128xf32, #tpu.memory_space<vmem>>, %arg3: memref<128x256xf32, #tpu.memory_space<vmem>>, %arg4: memref<1x256xf32, #tpu.memory_space<vmem>>, %arg5: memref<8x256xf32, #tpu.memory_space<vmem>>) attributes {dimension_semantics = [#tpu.dimension_semantics<parallel>], iteration_bounds = array<i64: 1>, scalar_prefetch = 0 : i64, scratch_operands = 0 : i64, tpu.core_type = #tpu.core_type<tc>, window_params = [{transform_indices = @transform_0, window_bounds = array<i64: 8, 256>}, {pipeline_mode = #tpu.pipeline_mode<synchronous>, transform_indices = @transform_1, window_bounds = array<i64: 256, 128>}, {pipeline_mode = #tpu.pipeline_mode<synchronous>, transform_indices = @transform_2, window_bounds = array<i64: 128, 256>}, {pipeline_mode = #tpu.pipeline_mode<synchronous>, transform_indices = @transform_3, window_bounds = array<i64: 1, 256>}, {transform_indices = @transform_4, window_bounds = array<i64: 8, 256>}]} {
    %c0 = arith.constant 0 : index
    %c0_0 = arith.constant 0 : index
    %0 = vector.load %arg1[%c0, %c0_0] : memref<8x256xf32, #tpu.memory_space<vmem>>, vector<8x256xf32>
    %c0_1 = arith.constant 0 : index
    %c0_2 = arith.constant 0 : index
    %1 = vector.load %arg2[%c0_1, %c0_2] : memref<256x128xf32, #tpu.memory_space<vmem>>, vector<256x128xf32>
    %cst = arith.constant dense<0.000000e+00> : vector<8x128xf32>
    %2 = tpu.matmul %0, %1, %cst {dimension_numbers = #tpu.dot_dimension_numbers<[1], [0], [0], [1], [0, 0, 1, 1], [], []>} : vector<8x256xf32>, vector<256x128xf32>, vector<8x128xf32> -> vector<8x128xf32>
    %c0_3 = arith.constant 0 : index
    %c0_4 = arith.constant 0 : index
    %3 = vector.load %arg3[%c0_3, %c0_4] : memref<128x256xf32, #tpu.memory_space<vmem>>, vector<128x256xf32>
    %cst_5 = arith.constant dense<0.000000e+00> : vector<8x256xf32>
    %4 = tpu.matmul %2, %3, %cst_5 {dimension_numbers = #tpu.dot_dimension_numbers<[1], [0], [0], [1], [0, 0, 1, 1], [], []>} : vector<8x128xf32>, vector<128x256xf32>, vector<8x256xf32> -> vector<8x256xf32>
    %c0_6 = arith.constant 0 : index
    %c0_7 = arith.constant 0 : index
    %5 = vector.load %arg4[%c0_6, %c0_7] : memref<1x256xf32, #tpu.memory_space<vmem>>, vector<1x256xf32>
    %6 = vector.broadcast %5 : vector<1x256xf32> to vector<8x256xf32>
    %7 = arith.addf %4, %6 : vector<8x256xf32>
    %c0_8 = arith.constant 0 : index
    %c0_9 = arith.constant 0 : index
    %8 = vector.load %arg5[%c0_8, %c0_9] : memref<8x256xf32, #tpu.memory_space<vmem>>, vector<8x256xf32>
    tpu.vector_store %arg5[%c0_8, %c0_9], %7 {strides = array<i32>} : memref<8x256xf32, #tpu.memory_space<vmem>>, vector<8x256xf32>,
    return
  }
  func.func @transform_0(%arg0: i32) -> (i32, i32) {
    %c0_i32 = arith.constant 0 : i32
    %c0_i32_0 = arith.constant 0 : i32
    return %arg0, %c0_i32 : i32, i32
  }
  func.func @transform_1(%arg0: i32) -> (i32, i32) {
    %c0_i32 = arith.constant 0 : i32
    %c0_i32_0 = arith.constant 0 : i32
    %c0_i32_1 = arith.constant 0 : i32
    return %c0_i32, %c0_i32_0 : i32, i32
  }
  func.func @transform_2(%arg0: i32) -> (i32, i32) {
    %c0_i32 = arith.constant 0 : i32
    %c0_i32_0 = arith.constant 0 : i32
    %c0_i32_1 = arith.constant 0 : i32
    return %c0_i32, %c0_i32_0 : i32, i32
  }
  func.func @transform_3(%arg0: i32) -> (i32, i32) {
    %c0_i32 = arith.constant 0 : i32
    %c0_i32_0 = arith.constant 0 : i32
    %c0_i32_1 = arith.constant 0 : i32
    return %c0_i32, %c0_i32_0 : i32, i32
  }
  func.func @transform_4(%arg0: i32) -> (i32, i32) {
    %c0_i32 = arith.constant 0 : i32
    %c0_i32_0 = arith.constant 0 : i32
    return %arg0, %c0_i32 : i32, i32
  }
}

</mosaic_0001>

<llo_original>
// kernel: tpu_custom_call.1
$region0: #{tpu_custom_call.1}
  #allocation0 [shape = 'u32[]', space=smem, size = 0x4, offset = 0x4, fixed_abs, tag = 'smem constant byte address 0x4 - core index']
  #allocation1 [shape = 'u32[72,128]{1,0:T(1,128)}', space=vmem, size = 0x9000, scoped, tag = 'internal scratch']
  %s0 = inlined_call_operand.hbm [shape: f32[8,256], index: 0, kind: input, shape index: {}]
  %s1 = inlined_call_operand.hbm [shape: f32[256,128], index: 1, kind: input, shape index: {}]
  %s2 = inlined_call_operand.hbm [shape: f32[128,256], index: 2, kind: input, shape index: {}]
  %s3 = inlined_call_operand.vmem [shape: f32[1,256], index: 3, kind: input, shape index: {}]
  %s4 = inlined_call_operand.hbm [shape: f32[8,256], index: 4, kind: output, shape index: {}]
  %s5 = sld [smem:[#allocation0]]
  $region38: #{tpu_custom_call.1} parent=0
    _
  %s7 = ssub.s32 1, %s5
  %s8 = scalar_select 0, %s7, %s5
  $region1: #{tpu_custom_call.1} parent=0
    #allocation2 [shape = 'u8[8192]{0}', space=vmem, size = 0x2000, scoped, tag = 'input window, operand 0, single buffered']
    #allocation3 [shape = 's32[1]{0}', space=sflag, size = 0x4, scoped, tag = 'scoped memory for tpu_custom_call.1']
    #allocation4 [shape = 's32[1]{0}', space=sflag, size = 0x4, scoped, tag = 'scoped memory for tpu_custom_call.1']
    #allocation5 [shape = 'u8[131072]{0}', space=vmem, size = 0x20000, scoped, tag = 'input window, operand 1, single buffered']
    #allocation6 [shape = 's32[1]{0}', space=sflag, size = 0x4, scoped, tag = 'scoped memory for tpu_custom_call.1']
    #allocation7 [shape = 'u8[131072]{0}', space=vmem, size = 0x20000, scoped, tag = 'input window, operand 2, single buffered']
    #allocation8 [shape = 'u8[8192]{0}', space=vmem, size = 0x2000, scoped, tag = 'output window, operand 0, single buffered']
    %9 = vsyncpa [#allocation3], 0
    %10 = vsyncpa [#allocation6], 0
    %11 = vsyncpa [#allocation4], 0
    // Predicated region
    $region2: #{tpu_custom_call.1} parent=1 // pred_check
      _
    $region3: #{tpu_custom_call.1} parent=1 // pred_check_branch
      %13 = sbr.rel (0) target = $region5
    $region4: #{tpu_custom_call.1} parent=1 // pred_region
      %15 = vsyncadd [#allocation3], 0
      %s17 = sshll.u32 %s0, 4
      %s18 = int_to_ptr.hbm [resolvable:$true] %s17
      %s19 = sshll.u32 [#allocation2], 4
      %s20 = int_to_ptr.vmem [resolvable:$true] %s19
      %22 = dma.hbm_to_vmem [thread:$0]  %s18, 256, %s20, [#allocation3]
    $region5: #{tpu_custom_call.1} parent=1 // pred_fallthru
      _
    // Predicated region
    $region6: #{tpu_custom_call.1} parent=1 // pred_check
      _
    $region7: #{tpu_custom_call.1} parent=1 // pred_check_branch
      %24 = sbr.rel (0) target = $region9
    $region8: #{tpu_custom_call.1} parent=1 // pred_region
      %26 = vsyncadd [#allocation6], 0
      %s27 = sshll.u32 %s1, 4
      %s28 = int_to_ptr.hbm [resolvable:$true] %s27
      %s29 = sshll.u32 [#allocation5], 4
      %s30 = int_to_ptr.vmem [resolvable:$true] %s29
      %35 = dma.hbm_to_vmem [thread:$0]  %s28, 4096, %s30, [#allocation6], 128, 128, 8
    $region9: #{tpu_custom_call.1} parent=1 // pred_fallthru
      _
    // Predicated region
    $region10: #{tpu_custom_call.1} parent=1 // pred_check
      _
    $region11: #{tpu_custom_call.1} parent=1 // pred_check_branch
      %37 = sbr.rel (0) target = $region13
    $region12: #{tpu_custom_call.1} parent=1 // pred_region
      %39 = vsyncadd [#allocation6], 0
      %s40 = sshll.u32 %s2, 4
      %s41 = int_to_ptr.hbm [resolvable:$true] %s40
      %s42 = sshll.u32 [#allocation7], 4
      %s43 = int_to_ptr.vmem [resolvable:$true] %s42
      %48 = dma.hbm_to_vmem [thread:$0]  %s41, 4096, %s43, [#allocation6], 256, 256, 16
    $region13: #{tpu_custom_call.1} parent=1 // pred_fallthru
      _
    // Predicated region
    $region14: #{tpu_custom_call.1} parent=1 // pred_check
      _
    $region15: #{tpu_custom_call.1} parent=1 // pred_check_branch
      %50 = sbr.rel (0) target = $region17
    $region16: #{tpu_custom_call.1} parent=1 // pred_region
      _
    $region17: #{tpu_custom_call.1} parent=1 // pred_fallthru
      _
    // Predicated region
    $region18: #{tpu_custom_call.1} parent=1 // pred_check
      _
    $region19: #{tpu_custom_call.1} parent=1 // pred_check_branch
      %52 = sbr.rel (0) target = $region21
    $region20: #{tpu_custom_call.1} parent=1 // pred_region
      %54 = dma.done [#allocation3], 256
    $region21: #{tpu_custom_call.1} parent=1 // pred_fallthru
      _
    // Predicated region
    $region22: #{tpu_custom_call.1} parent=1 // pred_check
      _
    $region23: #{tpu_custom_call.1} parent=1 // pred_check_branch
      %56 = sbr.rel (0) target = $region25
    $region24: #{tpu_custom_call.1} parent=1 // pred_region
      %58 = dma.done [#allocation6], 4096
    $region25: #{tpu_custom_call.1} parent=1 // pred_fallthru
      _
    // Predicated region
    $region26: #{tpu_custom_call.1} parent=1 // pred_check
      _
    $region27: #{tpu_custom_call.1} parent=1 // pred_check_branch
      %60 = sbr.rel (0) target = $region29
    $region28: #{tpu_custom_call.1} parent=1 // pred_region
      %62 = dma.done [#allocation6], 4096
    $region29: #{tpu_custom_call.1} parent=1 // pred_fallthru
      _
    %v63 = vld [vmem:[#allocation2] sm:$0xff]
    %v64 = vld [vmem:[#allocation2 + $0x8] sm:$0xff]
    %v65 = vld [vmem:[#allocation5] sm:$0xff]
    %v66 = vld [vmem:[#allocation5 + $0x8] sm:$0xff]
    %v67 = vld [vmem:[#allocation5 + $0x10] sm:$0xff]
    %v68 = vld [vmem:[#allocation5 + $0x18] sm:$0xff]
    %v69 = vld [vmem:[#allocation5 + $0x20] sm:$0xff]
    %v70 = vld [vmem:[#allocation5 + $0x28] sm:$0xff]
    %v71 = vld [vmem:[#allocation5 + $0x30] sm:$0xff]
    %v72 = vld [vmem:[#allocation5 + $0x38] sm:$0xff]
    %v73 = vld [vmem:[#allocation5 + $0x40] sm:$0xff]
    %v74 = vld [vmem:[#allocation5 + $0x48] sm:$0xff]
    %v75 = vld [vmem:[#allocation5 + $0x50] sm:$0xff]
    %v76 = vld [vmem:[#allocation5 + $0x58] sm:$0xff]
    %v77 = vld [vmem:[#allocation5 + $0x60] sm:$0xff]
    %v78 = vld [vmem:[#allocation5 + $0x68] sm:$0xff]
    %v79 = vld [vmem:[#allocation5 + $0x70] sm:$0xff]
    %v80 = vld [vmem:[#allocation5 + $0x78] sm:$0xff]
    %v81 = vld [vmem:[#allocation5 + $0x80] sm:$0xff]
    %v82 = vld [vmem:[#allocation5 + $0x88] sm:$0xff]
    %v83 = vld [vmem:[#allocation5 + $0x90] sm:$0xff]
    %v84 = vld [vmem:[#allocation5 + $0x98] sm:$0xff]
    %v85 = vld [vmem:[#allocation5 + $0xa0] sm:$0xff]
    %v86 = vld [vmem:[#allocation5 + $0xa8] sm:$0xff]
    %v87 = vld [vmem:[#allocation5 + $0xb0] sm:$0xff]
    %v88 = vld [vmem:[#allocation5 + $0xb8] sm:$0xff]
    %v89 = vld [vmem:[#allocation5 + $0xc0] sm:$0xff]
    %v90 = vld [vmem:[#allocation5 + $0xc8] sm:$0xff]
    %v91 = vld [vmem:[#allocation5 + $0xd0] sm:$0xff]
    %v92 = vld [vmem:[#allocation5 + $0xd8] sm:$0xff]
    %v93 = vld [vmem:[#allocation5 + $0xe0] sm:$0xff]
    %v94 = vld [vmem:[#allocation5 + $0xe8] sm:$0xff]
    %v95 = vld [vmem:[#allocation5 + $0xf0] sm:$0xff]
    %v96 = vld [vmem:[#allocation5 + $0xf8] sm:$0xff]
    %97 = vmatpush.msra.mxu0 %v80
    %98 = vmatpush.msra.mxu0 %v79
    %99 = vmatpush.msra.mxu0 %v78
    %100 = vmatpush.msra.mxu0 %v77
    %101 = vmatpush.msra.mxu0 %v76
    %102 = vmatpush.msra.mxu0 %v75
    %103 = vmatpush.msra.mxu0 %v74
    %104 = vmatpush.msra.mxu0 %v73
    %105 = vmatpush.msra.mxu0 %v72
    %106 = vmatpush.msra.mxu0 %v71
    %107 = vmatpush.msra.mxu0 %v70
    %108 = vmatpush.msra.mxu0 %v69
    %109 = vmatpush.msra.mxu0 %v68
    %110 = vmatpush.msra.mxu0 %v67
    %111 = vmatpush.msra.mxu0 %v66
    %112 = vmatpush.msra.mxu0 %v65
    %113 = vmatmul.f32.gmra.mxu0 %v63
    %v114 = vpop.f32.mrf.mxu0
    %v115 = vadd.f32 0.0, %v114
    %116 = vdwg.mxu0
    %117 = vmatpush.msra.mxu0 %v96
    %118 = vmatpush.msra.mxu0 %v95
    %119 = vmatpush.msra.mxu0 %v94
    %120 = vmatpush.msra.mxu0 %v93
    %121 = vmatpush.msra.mxu0 %v92
    %122 = vmatpush.msra.mxu0 %v91
    %123 = vmatpush.msra.mxu0 %v90
    %124 = vmatpush.msra.mxu0 %v89
    %125 = vmatpush.msra.mxu0 %v88
    %126 = vmatpush.msra.mxu0 %v87
    %127 = vmatpush.msra.mxu0 %v86
    %128 = vmatpush.msra.mxu0 %v85
    %129 = vmatpush.msra.mxu0 %v84
    %130 = vmatpush.msra.mxu0 %v83
    %131 = vmatpush.msra.mxu0 %v82
    %132 = vmatpush.msra.mxu0 %v81
    %133 = vmatmul.f32.gmra.mxu0 %v64
    %v134 = vpop.f32.mrf.mxu0
    %v135 = vadd.f32 %v115, %v134
    %136 = vdwg.mxu0
    %v137 = vld [vmem:[#allocation7] sm:$0xff]
    %v138 = vld [vmem:[#allocation7 + $0x8] sm:$0xff]
    %v139 = vld [vmem:[#allocation7 + $0x10] sm:$0xff]
    %v140 = vld [vmem:[#allocation7 + $0x18] sm:$0xff]
    %v141 = vld [vmem:[#allocation7 + $0x20] sm:$0xff]
    %v142 = vld [vmem:[#allocation7 + $0x28] sm:$0xff]
    %v143 = vld [vmem:[#allocation7 + $0x30] sm:$0xff]
    %v144 = vld [vmem:[#allocation7 + $0x38] sm:$0xff]
    %v145 = vld [vmem:[#allocation7 + $0x40] sm:$0xff]
    %v146 = vld [vmem:[#allocation7 + $0x48] sm:$0xff]
    %v147 = vld [vmem:[#allocation7 + $0x50] sm:$0xff]
    %v148 = vld [vmem:[#allocation7 + $0x58] sm:$0xff]
    %v149 = vld [vmem:[#allocation7 + $0x60] sm:$0xff]
    %v150 = vld [vmem:[#allocation7 + $0x68] sm:$0xff]
    %v151 = vld [vmem:[#allocation7 + $0x70] sm:$0xff]
    %v152 = vld [vmem:[#allocation7 + $0x78] sm:$0xff]
    %v153 = vld [vmem:[#allocation7 + $0x80] sm:$0xff]
    %v154 = vld [vmem:[#allocation7 + $0x88] sm:$0xff]
    %v155 = vld [vmem:[#allocation7 + $0x90] sm:$0xff]
    %v156 = vld [vmem:[#allocation7 + $0x98] sm:$0xff]
    %v157 = vld [vmem:[#allocation7 + $0xa0] sm:$0xff]
    %v158 = vld [vmem:[#allocation7 + $0xa8] sm:$0xff]
    %v159 = vld [vmem:[#allocation7 + $0xb0] sm:$0xff]
    %v160 = vld [vmem:[#allocation7 + $0xb8] sm:$0xff]
    %v161 = vld [vmem:[#allocation7 + $0xc0] sm:$0xff]
    %v162 = vld [vmem:[#allocation7 + $0xc8] sm:$0xff]
    %v163 = vld [vmem:[#allocation7 + $0xd0] sm:$0xff]
    %v164 = vld [vmem:[#allocation7 + $0xd8] sm:$0xff]
    %v165 = vld [vmem:[#allocation7 + $0xe0] sm:$0xff]
    %v166 = vld [vmem:[#allocation7 + $0xe8] sm:$0xff]
    %v167 = vld [vmem:[#allocation7 + $0xf0] sm:$0xff]
    %v168 = vld [vmem:[#allocation7 + $0xf8] sm:$0xff]
    %v169 = vld [vmem:[%s3] sm:$0x3]
    %v171 = vperm.slane %v169, 0
    %v172 = vperm.slane %v169, 1
    %175 = vmatpush.msra.mxu0 %v167
    %176 = vmatpush.msra.mxu0 %v165
    %177 = vmatpush.msra.mxu0 %v163
    %178 = vmatpush.msra.mxu0 %v161
    %179 = vmatpush.msra.mxu0 %v159
    %180 = vmatpush.msra.mxu0 %v157
    %181 = vmatpush.msra.mxu0 %v155
    %182 = vmatpush.msra.mxu0 %v153
    %183 = vmatpush.msra.mxu0 %v151
    %184 = vmatpush.msra.mxu0 %v149
    %185 = vmatpush.msra.mxu0 %v147
    %186 = vmatpush.msra.mxu0 %v145
    %187 = vmatpush.msra.mxu0 %v143
    %188 = vmatpush.msra.mxu0 %v141
    %189 = vmatpush.msra.mxu0 %v139
    %190 = vmatpush.msra.mxu0 %v137
    %191 = vmatmul.f32.gmra.mxu0 %v135
    %v192 = vpop.f32.mrf.mxu0
    %v193 = vadd.f32 %v171, %v192
    %194 = vdwg.mxu0
    %195 = vmatpush.msra.mxu0 %v168
    %196 = vmatpush.msra.mxu0 %v166
    %197 = vmatpush.msra.mxu0 %v164
    %198 = vmatpush.msra.mxu0 %v162
    %199 = vmatpush.msra.mxu0 %v160
    %200 = vmatpush.msra.mxu0 %v158
    %201 = vmatpush.msra.mxu0 %v156
    %202 = vmatpush.msra.mxu0 %v154
    %203 = vmatpush.msra.mxu0 %v152
    %204 = vmatpush.msra.mxu0 %v150
    %205 = vmatpush.msra.mxu0 %v148
    %206 = vmatpush.msra.mxu0 %v146
    %207 = vmatpush.msra.mxu0 %v144
    %208 = vmatpush.msra.mxu0 %v142
    %209 = vmatpush.msra.mxu0 %v140
    %210 = vmatpush.msra.mxu0 %v138
    %211 = vmatmul.f32.gmra.mxu0 %v135
    %v212 = vpop.f32.mrf.mxu0
    %v213 = vadd.f32 %v172, %v212
    %214 = vdwg.mxu0
    %215 = vst [vmem:[#allocation8] sm:$0xff] %v193
    %216 = vst [vmem:[#allocation8 + $0x8] sm:$0xff] %v213
    // Predicated region
    $region30: #{tpu_custom_call.1} parent=1 // pred_check
      _
    $region31: #{tpu_custom_call.1} parent=1 // pred_check_branch
      %218 = sbr.rel (0) target = $region33
    $region32: #{tpu_custom_call.1} parent=1 // pred_region
      %220 = vsyncadd [#allocation4], 0
      %s222 = sshll.u32 [#allocation8], 4
      %s223 = int_to_ptr.vmem [resolvable:$true] %s222
      %s224 = sshll.u32 %s4, 4
      %s225 = int_to_ptr.hbm [resolvable:$true] %s224
      %227 = dma.vmem_to_hbm [thread:$0]  %s223, 256, %s225, [#allocation4]
    $region33: #{tpu_custom_call.1} parent=1 // pred_fallthru
      _
    // Predicated region
    $region34: #{tpu_custom_call.1} parent=1 // pred_check
      _
    $region35: #{tpu_custom_call.1} parent=1 // pred_check_branch
      %229 = sbr.rel (0) target = $region37
    $region36: #{tpu_custom_call.1} parent=1 // pred_region
      %231 = dma.done [#allocation4], 256
    $region37: #{tpu_custom_call.1} parent=1 // pred_fallthru
      _
    %232 = vsyncpa [#allocation3], 1
    %233 = vsyncpa [#allocation6], 1
    %234 = vsyncpa [#allocation4], 1

</llo_original>
